<compile_context>
chip_gen: v7x
topology: tpu7x:2x2x1
jax: 0.10.0
libtpu: 0.0.40
codegen_flags: <defaults>
</compile_context>

<pallas_src>
import jax
import jax.numpy as jnp
from jax.experimental import pallas as pl
from jax.experimental.pallas import tpu as pltpu


def mlp_kernel(xr_ref, w1c_ref, b1c_ref, w2c_ref, b2_ref, o_ref):
    # xr:  (1, Bp)      batch on the lane axis (Bp = batch padded to 128)
    # w1c / b1c / w2c: (hidden, 1) column vectors (broadcast across lanes)
    # b2:  (1,) scalar in SMEM
    x = xr_ref[...]                                            # (1, Bp)
    h = jnp.maximum(w1c_ref[...] * x + b1c_ref[...], 0.0)      # (hidden, Bp) VPU
    y = jnp.sum(h * w2c_ref[...], axis=0, keepdims=True)       # (1, Bp) XLU sublane reduce
    o_ref[...] = y + b2_ref[0]                                 # unmasked lane-dense store


def net_forward(x, w1, b1, w2, b2):
    n, f = x.shape            # f == n_feature == 1
    _, h = w1.shape           # h == n_hidden
    _, o = w2.shape           # o == n_output == 1

    # Pad batch to a multiple of 128 and put it on the lane axis.
    bp = ((n + 127) // 128) * 128
    xr = jnp.zeros((1, bp), jnp.float32).at[0, :n].set(x[:, 0])

    # Hidden dim becomes the sublane axis; all params are (hidden, 1) columns.
    w1c = w1.reshape(h, 1)    # (1, hidden) -> (hidden, 1)
    b1c = b1.reshape(h, 1)
    w2c = w2.reshape(h, 1)    # already a column
    b2s = b2.reshape(o)       # (1,) scalar bias -> SMEM

    out = pl.pallas_call(
        mlp_kernel,
        out_shape=jax.ShapeDtypeStruct((1, bp), jnp.float32),
        grid=(1,),
        in_specs=[
            pl.BlockSpec((1, bp), lambda i: (0, 0)),              # x row (lane-dense)
            pl.BlockSpec((h, 1), lambda i: (0, 0)),               # w1 column
            pl.BlockSpec((h, 1), lambda i: (0, 0)),               # b1 column
            pl.BlockSpec((h, 1), lambda i: (0, 0)),               # w2 column
            pl.BlockSpec(memory_space=pltpu.MemorySpace.SMEM),    # b2 scalar
        ],
        out_specs=pl.BlockSpec((1, bp), lambda i: (0, 0)),
        compiler_params=pltpu.CompilerParams(
            dimension_semantics=("arbitrary",)),
    )(xr, w1c, b1c, w2c, b2s)

    # Drop the lane padding and restore the (batch, n_output) shape.
    return out[0, :n].reshape(n, o)


def init_linear_params(key, fan_in, fan_out):
    """Deterministic init matching torch.nn.Linear: U(-1/sqrt(fan_in), 1/sqrt(fan_in))."""
    kw, kb = jax.random.split(key)
    bound = 1.0 / jnp.sqrt(jnp.float32(fan_in))
    # stored as (in, out) so the wrapper/kernel can do x @ W directly
    w = jax.random.uniform(kw, (fan_in, fan_out), jnp.float32, -bound, bound)
    b = jax.random.uniform(kb, (1, fan_out), jnp.float32, -bound, bound)
    return w, b


if __name__ == "__main__":
    # Net(n_feature=1, n_hidden=32, n_output=1) applied to
    # x = torch.unsqueeze(torch.linspace(-1, 1, 100), dim=1) -> shape (100, 1).
    n_feature, n_hidden, n_output = 1, 32, 1
    batch = 100

    key = jax.random.PRNGKey(0)
    k1, k2 = jax.random.split(key)
    w1, b1 = init_linear_params(k1, n_feature, n_hidden)
    w2, b2 = init_linear_params(k2, n_hidden, n_output)

    x = jnp.linspace(-1.0, 1.0, batch, dtype=jnp.float32).reshape(batch, n_feature)

    out = net_forward(x, w1, b1, w2, b2)
    jax.block_until_ready(out)

    # sanity check against a pure-JAX reference of the same math
    ref = jnp.maximum(x @ w1 + b1, 0.0) @ w2 + b2
    assert out.shape == (batch, n_output)
    assert jnp.allclose(out, ref, atol=1e-5, rtol=1e-5)

    print("KERNEL_OK")
</pallas_src>

<mosaic_0001>
module attributes {stable_mosaic.version = 11 : i64} {
  func.func @mlp_kernel(%arg0: i32, %arg1: memref<1x128xf32, #tpu.memory_space<vmem>>, %arg2: memref<32x1xf32, #tpu.memory_space<vmem>>, %arg3: memref<32x1xf32, #tpu.memory_space<vmem>>, %arg4: memref<32x1xf32, #tpu.memory_space<vmem>>, %arg5: memref<1xf32, #tpu.memory_space<smem>>, %arg6: memref<1x128xf32, #tpu.memory_space<vmem>>) attributes {dimension_semantics = [#tpu.dimension_semantics<arbitrary>], iteration_bounds = array<i64: 1>, scalar_prefetch = 0 : i64, scratch_operands = 0 : i64, tpu.core_type = #tpu.core_type<tc>, window_params = [{pipeline_mode = #tpu.pipeline_mode<synchronous>, transform_indices = @transform_0, window_bounds = array<i64: 1, 128>}, {pipeline_mode = #tpu.pipeline_mode<synchronous>, transform_indices = @transform_1, window_bounds = array<i64: 32, 1>}, {pipeline_mode = #tpu.pipeline_mode<synchronous>, transform_indices = @transform_2, window_bounds = array<i64: 32, 1>}, {pipeline_mode = #tpu.pipeline_mode<synchronous>, transform_indices = @transform_3, window_bounds = array<i64: 32, 1>}, {transform_indices = @transform_4, window_bounds = array<i64: 1>}, {pipeline_mode = #tpu.pipeline_mode<synchronous>, transform_indices = @transform_5, window_bounds = array<i64: 1, 128>}]} {
    %c0 = arith.constant 0 : index
    %c0_0 = arith.constant 0 : index
    %0 = vector.load %arg1[%c0, %c0_0] : memref<1x128xf32, #tpu.memory_space<vmem>>, vector<1x128xf32>
    %c0_1 = arith.constant 0 : index
    %c0_2 = arith.constant 0 : index
    %1 = vector.load %arg2[%c0_1, %c0_2] : memref<32x1xf32, #tpu.memory_space<vmem>>, vector<32x1xf32>
    %2 = vector.broadcast %1 : vector<32x1xf32> to vector<32x128xf32>
    %3 = vector.broadcast %0 : vector<1x128xf32> to vector<32x128xf32>
    %4 = arith.mulf %2, %3 : vector<32x128xf32>
    %c0_3 = arith.constant 0 : index
    %c0_4 = arith.constant 0 : index
    %5 = vector.load %arg3[%c0_3, %c0_4] : memref<32x1xf32, #tpu.memory_space<vmem>>, vector<32x1xf32>
    %6 = vector.broadcast %5 : vector<32x1xf32> to vector<32x128xf32>
    %7 = arith.addf %4, %6 : vector<32x128xf32>
    %cst = arith.constant 0.000000e+00 : f32
    %8 = vector.broadcast %cst : f32 to vector<32x128xf32>
    %9 = arith.maximumf %7, %8 : vector<32x128xf32>
    %c0_5 = arith.constant 0 : index
    %c0_6 = arith.constant 0 : index
    %10 = vector.load %arg4[%c0_5, %c0_6] : memref<32x1xf32, #tpu.memory_space<vmem>>, vector<32x1xf32>
    %11 = vector.broadcast %10 : vector<32x1xf32> to vector<32x128xf32>
    %12 = arith.mulf %9, %11 : vector<32x128xf32>
    %cst_7 = arith.constant dense<0.000000e+00> : vector<128xf32>
    %13 = vector.multi_reduction <add>, %12, %cst_7 [0] : vector<32x128xf32> to vector<128xf32>
    %14 = vector.shape_cast %13 : vector<128xf32> to vector<1x128xf32>
    %c0_8 = arith.constant 0 : index
    %15 = memref.load %arg5[%c0_8] : memref<1xf32, #tpu.memory_space<smem>>
    %16 = vector.broadcast %15 : f32 to vector<1x128xf32>
    %17 = arith.addf %14, %16 : vector<1x128xf32>
    %c0_9 = arith.constant 0 : index
    %c0_10 = arith.constant 0 : index
    %18 = vector.load %arg6[%c0_9, %c0_10] : memref<1x128xf32, #tpu.memory_space<vmem>>, vector<1x128xf32>
    tpu.vector_store %arg6[%c0_9, %c0_10], %17 {strides = array<i32>} : memref<1x128xf32, #tpu.memory_space<vmem>>, vector<1x128xf32>,
    return
  }
  func.func @transform_0(%arg0: i32) -> (i32, i32) {
    %c0_i32 = arith.constant 0 : i32
    %c0_i32_0 = arith.constant 0 : i32
    %c0_i32_1 = arith.constant 0 : i32
    return %c0_i32, %c0_i32_0 : i32, i32
  }
  func.func @transform_1(%arg0: i32) -> (i32, i32) {
    %c0_i32 = arith.constant 0 : i32
    %c0_i32_0 = arith.constant 0 : i32
    %c0_i32_1 = arith.constant 0 : i32
    return %c0_i32, %c0_i32_0 : i32, i32
  }
  func.func @transform_2(%arg0: i32) -> (i32, i32) {
    %c0_i32 = arith.constant 0 : i32
    %c0_i32_0 = arith.constant 0 : i32
    %c0_i32_1 = arith.constant 0 : i32
    return %c0_i32, %c0_i32_0 : i32, i32
  }
  func.func @transform_3(%arg0: i32) -> (i32, i32) {
    %c0_i32 = arith.constant 0 : i32
    %c0_i32_0 = arith.constant 0 : i32
    %c0_i32_1 = arith.constant 0 : i32
    return %c0_i32, %c0_i32_0 : i32, i32
  }
  func.func @transform_4(%arg0: i32) -> i32 {
    %c0_i32 = arith.constant 0 : i32
    %c0_i32_0 = arith.constant 0 : i32
    return %c0_i32 : i32
  }
  func.func @transform_5(%arg0: i32) -> (i32, i32) {
    %c0_i32 = arith.constant 0 : i32
    %c0_i32_0 = arith.constant 0 : i32
    %c0_i32_1 = arith.constant 0 : i32
    return %c0_i32, %c0_i32_0 : i32, i32
  }
}

</mosaic_0001>

<llo_original>
// kernel: tpu_custom_call.1
$region0: #{tpu_custom_call.1}
  #allocation0 [shape = 'u32[]', space=smem, size = 0x4, offset = 0x4, fixed_abs, tag = 'smem constant byte address 0x4 - core index']
  #allocation1 [shape = 'u32[144,128]{1,0:T(1,128)}', space=vmem, size = 0x12000, scoped, tag = 'internal scratch']
  #allocation2 [shape = 'f32[1]{0:T(128)S(6)}', space=smem, size = 0x200, scoped, tag = 'scoped memory for tpu_custom_call.1']
  %s0 = inlined_call_operand.vmem [shape: f32[1,128], index: 0, kind: input, shape index: {}]
  %s1 = inlined_call_operand.vmem [shape: f32[32,1], index: 1, kind: input, shape index: {}]
  %s2 = inlined_call_operand.vmem [shape: f32[32,1], index: 2, kind: input, shape index: {}]
  %s3 = inlined_call_operand.vmem [shape: f32[32,1], index: 3, kind: input, shape index: {}]
  %s4 = inlined_call_operand.<no memory space> [shape: f32[1], index: 4, kind: input, shape index: {}]
  %s5 = inlined_call_operand.hbm [shape: f32[1,128], index: 5, kind: output, shape index: {}]
  %s6 = sld [smem:[#allocation0]]
  $region30: #{tpu_custom_call.1} parent=0
    _
  %s8 = ssub.s32 1, %s6
  %s9 = scalar_select 0, %s8, %s6
  %10 = sst [smem:[#allocation2]] %s4
  $region1: #{tpu_custom_call.1} parent=0
    #allocation3 [shape = 'u8[512]{0}', space=vmem, size = 0x400, scoped, tag = 'output window, operand 0, single buffered']
    #allocation4 [shape = 's32[1]{0}', space=sflag, size = 0x4, scoped, tag = 'scoped memory for tpu_custom_call.1']
    %11 = vsyncpa [#allocation4], 0
    // Predicated region
    $region2: #{tpu_custom_call.1} parent=1 // pred_check
      _
    $region3: #{tpu_custom_call.1} parent=1 // pred_check_branch
      %13 = sbr.rel (0) target = $region5
    $region4: #{tpu_custom_call.1} parent=1 // pred_region
      _
    $region5: #{tpu_custom_call.1} parent=1 // pred_fallthru
      _
    // Predicated region
    $region6: #{tpu_custom_call.1} parent=1 // pred_check
      _
    $region7: #{tpu_custom_call.1} parent=1 // pred_check_branch
      %15 = sbr.rel (0) target = $region9
    $region8: #{tpu_custom_call.1} parent=1 // pred_region
      _
    $region9: #{tpu_custom_call.1} parent=1 // pred_fallthru
      _
    // Predicated region
    $region10: #{tpu_custom_call.1} parent=1 // pred_check
      _
    $region11: #{tpu_custom_call.1} parent=1 // pred_check_branch
      %17 = sbr.rel (0) target = $region13
    $region12: #{tpu_custom_call.1} parent=1 // pred_region
      _
    $region13: #{tpu_custom_call.1} parent=1 // pred_fallthru
      _
    // Predicated region
    $region14: #{tpu_custom_call.1} parent=1 // pred_check
      _
    $region15: #{tpu_custom_call.1} parent=1 // pred_check_branch
      %19 = sbr.rel (0) target = $region17
    $region16: #{tpu_custom_call.1} parent=1 // pred_region
      _
    $region17: #{tpu_custom_call.1} parent=1 // pred_fallthru
      _
    // Predicated region
    $region18: #{tpu_custom_call.1} parent=1 // pred_check
      _
    $region19: #{tpu_custom_call.1} parent=1 // pred_check_branch
      %21 = sbr.rel (0) target = $region21
    $region20: #{tpu_custom_call.1} parent=1 // pred_region
      _
    $region21: #{tpu_custom_call.1} parent=1 // pred_fallthru
      _
    %v22 = vld [vmem:[%s0] sm:$0x1]
    %v23 = vld [vmem:[%s1] sm:$0xff]
    %v24 = vld [vmem:[%s1 + $0x8] sm:$0xff]
    %v25 = vld [vmem:[%s1 + $0x10] sm:$0xff]
    %v26 = vld [vmem:[%s1 + $0x18] sm:$0xff]
    %28 = vset.pattern.permute.xlu0 0
    %29 = vperm.xlu0 %28, %v23
    %v30 = vpop.permute.xlu0 %29
    %33 = vset.pattern.permute.xlu0 0
    %34 = vperm.xlu0 %33, %v24
    %v35 = vpop.permute.xlu0 %34
    %38 = vset.pattern.permute.xlu0 0
    %39 = vperm.xlu0 %38, %v25
    %v40 = vpop.permute.xlu0 %39
    %43 = vset.pattern.permute.xlu0 0
    %44 = vperm.xlu0 %43, %v26
    %v45 = vpop.permute.xlu0 %44
    %v48 = vlaneseq
    %v49 = vshrl.u32 %v48, 7
    %v50 = vsub.s32 0, %v49
    %v51 = vrot.slane %v22, %v50
    %v53 = vmul.f32 %v30, %v51
    %v54 = vmul.f32 %v35, %v51
    %v55 = vmul.f32 %v40, %v51
    %v56 = vmul.f32 %v45, %v51
    %v57 = vld [vmem:[%s2] sm:$0xff]
    %v58 = vld [vmem:[%s2 + $0x8] sm:$0xff]
    %v59 = vld [vmem:[%s2 + $0x10] sm:$0xff]
    %v60 = vld [vmem:[%s2 + $0x18] sm:$0xff]
    %62 = vset.pattern.permute.xlu0 0
    %63 = vperm.xlu0 %62, %v57
    %v64 = vpop.permute.xlu0 %63
    %67 = vset.pattern.permute.xlu0 0
    %68 = vperm.xlu0 %67, %v58
    %v69 = vpop.permute.xlu0 %68
    %72 = vset.pattern.permute.xlu0 0
    %73 = vperm.xlu0 %72, %v59
    %v74 = vpop.permute.xlu0 %73
    %77 = vset.pattern.permute.xlu0 0
    %78 = vperm.xlu0 %77, %v60
    %v79 = vpop.permute.xlu0 %78
    %v81 = vadd.f32 %v53, %v64
    %v82 = vadd.f32 %v54, %v69
    %v83 = vadd.f32 %v55, %v74
    %v84 = vadd.f32 %v56, %v79
    %v85 = vmax.f32 %v81, 0.0
    %v86 = vmax.f32 %v82, 0.0
    %v87 = vmax.f32 %v83, 0.0
    %v88 = vmax.f32 %v84, 0.0
    %v89 = vld [vmem:[%s3] sm:$0xff]
    %v90 = vld [vmem:[%s3 + $0x8] sm:$0xff]
    %v91 = vld [vmem:[%s3 + $0x10] sm:$0xff]
    %v92 = vld [vmem:[%s3 + $0x18] sm:$0xff]
    %94 = vset.pattern.permute.xlu0 0
    %95 = vperm.xlu0 %94, %v89
    %v96 = vpop.permute.xlu0 %95
    %99 = vset.pattern.permute.xlu0 0
    %100 = vperm.xlu0 %99, %v90
    %v101 = vpop.permute.xlu0 %100
    %104 = vset.pattern.permute.xlu0 0
    %105 = vperm.xlu0 %104, %v91
    %v106 = vpop.permute.xlu0 %105
    %109 = vset.pattern.permute.xlu0 0
    %110 = vperm.xlu0 %109, %v92
    %v111 = vpop.permute.xlu0 %110
    %v113 = vmul.f32 %v85, %v96
    %v114 = vmul.f32 %v86, %v101
    %v115 = vmul.f32 %v87, %v106
    %v116 = vmul.f32 %v88, %v111
    %v117 = vadd.f32 %v113, %v114
    %v118 = vadd.f32 %v117, %v115
    %v119 = vadd.f32 %v118, %v116
    %v120 = vrot.slane %v119, 4
    %v121 = vadd.f32 %v119, %v120
    %v122 = vrot.slane %v121, 2
    %v123 = vadd.f32 %v121, %v122
    %v124 = vrot.slane %v123, 1
    %v125 = vadd.f32 %v123, %v124
    %s126 = sld [smem:[#allocation2]]
    %v127 = vstv %s126
    %v128 = vadd.f32 %v125, %v127
    %129 = vst [vmem:[#allocation3] sm:$0x1] %v128
    // Predicated region
    $region22: #{tpu_custom_call.1} parent=1 // pred_check
      _
    $region23: #{tpu_custom_call.1} parent=1 // pred_check_branch
      %131 = sbr.rel (0) target = $region25
    $region24: #{tpu_custom_call.1} parent=1 // pred_region
      %s133 = ssub.s32 16, 16
      %134 = vsyncadd [#allocation4], %s133
      %s136 = sshll.u32 [#allocation3], 4
      %s137 = int_to_ptr.vmem [resolvable:$true] %s136
      %139 = dma.vmem_to_hbm [thread:$0]  %s137, 16, %s5, [#allocation4]
    $region25: #{tpu_custom_call.1} parent=1 // pred_fallthru
      _
    // Predicated region
    $region26: #{tpu_custom_call.1} parent=1 // pred_check
      _
    $region27: #{tpu_custom_call.1} parent=1 // pred_check_branch
      %141 = sbr.rel (0) target = $region29
    $region28: #{tpu_custom_call.1} parent=1 // pred_region
      %142 = dma.done [#allocation4], 16
    $region29: #{tpu_custom_call.1} parent=1 // pred_fallthru
      _
    %143 = vsyncpa [#allocation4], 1

</llo_original>
